<compile_context>
chip_gen: v7x
topology: tpu7x:2x2x1
jax: 0.10.0
libtpu: 0.0.40
codegen_flags: <defaults>
</compile_context>

<pallas_src>
import numpy as np
import jax
import jax.numpy as jnp
from jax.experimental import pallas as pl
from jax.experimental.pallas import tpu as pltpu


# ----------------------------------------------------------------------------
# Tiled, pipelined matmul (used for the one-time weight pre-fusion).
# The f32 output block is K-resident, so accumulate directly into o_ref:
# no VMEM scratch, no finalize copy.
# ----------------------------------------------------------------------------
def _matmul_kernel(x_ref, w_ref, o_ref):
    @pl.when(pl.program_id(2) == 0)
    def _init():
        o_ref[...] = jnp.zeros_like(o_ref)

    o_ref[...] += jnp.dot(x_ref[...], w_ref[...],
                          preferred_element_type=jnp.float32)


def pallas_matmul(x, w, *, tm=512, tn=512, tk=512):
    """x: [M, K] @ w: [K, N] -> [M, N] float32 (tiles clamp to array dims).

    Per-generation tiling notes (tile size is the main HBM-roofline lever):
      * v6e (128 MiB VMEM): for real-sized projections grow tiles
        (e.g. tm=512, tn=1024, tk=1024) and raise vmem_limit_bytes to 64-96MB.
      * v5e: prefer wider K tiles over wider M tiles (single vst slot ->
        amortize the output writeback), keep tn/tk multiples of 128.
      * v7x (64 MiB physical VMEM): keep 2 inputs x 2 buffers x tile + output
        well under ~48 MiB; the 512 defaults here are safe on every chip.
    """
    M, K = x.shape
    K2, N = w.shape
    assert K == K2
    tm, tn, tk = min(tm, M), min(tn, N), min(tk, K)
    assert M % tm == 0 and N % tn == 0 and K % tk == 0
    grid = (M // tm, N // tn, K // tk)
    return pl.pallas_call(
        _matmul_kernel,
        out_shape=jax.ShapeDtypeStruct((M, N), jnp.float32),
        grid=grid,
        in_specs=[
            pl.BlockSpec((tm, tk), lambda i, j, k: (i, k)),
            pl.BlockSpec((tk, tn), lambda i, j, k: (k, j)),
        ],
        out_specs=pl.BlockSpec((tm, tn), lambda i, j, k: (i, j)),
        compiler_params=pltpu.CompilerParams(
            dimension_semantics=("parallel", "parallel", "arbitrary"),
            vmem_limit_bytes=32 * 1024 * 1024,
        ),
    )(x, w)


# ----------------------------------------------------------------------------
# Fully fused CLIP forward kernel body (shared between the 1-core and the
# v7x 2-core variants).
#   image_features = pooled_img @ W_img_fused          (bf16 MXU, f32 acc)
#   counts         = in-kernel token histogram          (VPU iota compares)
#   text_features  = counts @ W_txt_fused / L           (bf16 MXU, f32 acc)
#   image_features /= ||image_features||                 (no eps, as in module)
#   text_features  /= (||text_features|| + 1e-10)
#   logit_scale     = clamp(exp(logit_scale_param), max=100)   (SMEM scalar)
#   logits_per_image = logit_scale * img_n @ txt_n.T
#   logits_per_text  = logit_scale * txt_n @ img_n.T   (== lpi.T bit-exactly)
# (world_size == 1 -> gathered features == local features)
# ----------------------------------------------------------------------------
_SIM_DIMS = (((1,), (1,)), ((), ()))   # contract the feature dim, no transpose


def _clip_features(scale_ref, txt_ids_ref, img_x_ref, img_w_ref, txt_w_ref):
    B, L = txt_ids_ref.shape
    V, _ = txt_w_ref.shape

    # -- image path: pooled pixels @ fused (patch-embed @ proj) weight (MXU).
    img = jnp.dot(img_x_ref[...], img_w_ref[...],
                  preferred_element_type=jnp.float32)            # [B, D] f32

    # -- text path: build token counts in-kernel (no HBM one-hot intermediate).
    #    Column l of the token ids is extracted with a masked lane-reduce
    #    (standard select + sum ops; avoids sub-lane slicing), then compared
    #    against a vocab iota to accumulate the histogram.
    tok = txt_ids_ref[...]                                       # [B, L] int32
    pos = jax.lax.broadcasted_iota(jnp.int32, (B, L), 1)         # [B, L]
    vocab_iota = jax.lax.broadcasted_iota(jnp.int32, (B, V), 1)  # [B, V]
    counts = jnp.zeros((B, V), jnp.float32)
    for l in range(L):                      # L small & static -> unrolled VPU
        tok_l = jnp.sum(jnp.where(pos == l, tok, 0),
                        axis=1, keepdims=True)                   # [B, 1]
        counts = counts + (vocab_iota == tok_l).astype(jnp.float32)
    # counts @ (tok_emb @ txt_proj): the MXU does the gather+sum; the 1/L
    # (mean) is applied to the f32 accumulator (integer counts are bf16-exact).
    txt = jnp.dot(counts.astype(jnp.bfloat16), txt_w_ref[...],
                  preferred_element_type=jnp.float32) * (1.0 / L)  # [B, D]

    # -- exact L2 normalization (matches the torch module, incl. the text eps).
    img_n = img / jnp.sqrt(jnp.sum(img * img, axis=-1, keepdims=True))
    txt_n = txt / (jnp.sqrt(jnp.sum(txt * txt, axis=-1, keepdims=True)) + 1e-10)

    # -- logit_scale: SMEM scalar -> splat to one vreg -> exp -> clamp(100).
    log_scale = scale_ref[0] * jnp.ones((1, 1), dtype=jnp.float32)
    scale = jnp.minimum(jnp.exp(log_scale), 100.0)               # [1, 1]
    return scale, img_n, txt_n


def _clip_kernel_single(scale_ref, txt_ids_ref, img_x_ref, img_w_ref,
                        txt_w_ref, lpi_ref, lpt_ref):
    scale, img_n, txt_n = _clip_features(scale_ref, txt_ids_ref, img_x_ref,
                                         img_w_ref, txt_w_ref)
    lpi_ref[...] = scale * jax.lax.dot_general(
        img_n, txt_n, _SIM_DIMS, preferred_element_type=jnp.float32)
    lpt_ref[...] = scale * jax.lax.dot_general(
        txt_n, img_n, _SIM_DIMS, preferred_element_type=jnp.float32)


def _clip_kernel_split(scale_ref, txt_ids_ref, img_x_ref, img_w_ref,
                       txt_w_ref, out_ref):
    # grid=(2,) "parallel": on v7x core 0 writes logits_per_image (slab 0) and
    # core 1 writes logits_per_text (slab 1). Each grid step owns a distinct
    # HBM output slab, so there is no cross-core writeback race.
    scale, img_n, txt_n = _clip_features(scale_ref, txt_ids_ref, img_x_ref,
                                         img_w_ref, txt_w_ref)
    core = pl.program_id(0)

    @pl.when(core == 0)
    def _():
        out_ref[0] = scale * jax.lax.dot_general(
            img_n, txt_n, _SIM_DIMS, preferred_element_type=jnp.float32)

    @pl.when(core == 1)
    def _():
        out_ref[0] = scale * jax.lax.dot_general(
            txt_n, img_n, _SIM_DIMS, preferred_element_type=jnp.float32)


def _num_tensorcores():
    """Best-effort: 2 TensorCores/chip on v7x, 1 on v5e/v6e."""
    try:
        kind = jax.devices()[0].device_kind.lower()
    except Exception:
        return 1
    return 2 if ("v7" in kind or "tpu7" in kind) else 1


def clip_fused_forward(logit_scale, texts, pooled_img, w_img, w_txt,
                       *, num_cores=None):
    B, Ki = pooled_img.shape
    _, L = texts.shape
    V, D = w_txt.shape
    if num_cores is None:
        num_cores = _num_tensorcores()

    in_specs = [
        # scalar logit_scale in SMEM (no padded VMEM tile / vld slot)
        pl.BlockSpec(memory_space=pltpu.MemorySpace.SMEM),
        pl.BlockSpec((B, L), lambda i: (0, 0)),     # token ids (tiny, VMEM)
        pl.BlockSpec((B, Ki), lambda i: (0, 0)),
        pl.BlockSpec((Ki, D), lambda i: (0, 0)),
        pl.BlockSpec((V, D), lambda i: (0, 0)),
    ]

    if num_cores == 2:
        out = pl.pallas_call(
            _clip_kernel_split,
            out_shape=jax.ShapeDtypeStruct((2, B, B), jnp.float32),
            grid=(2,),
            in_specs=in_specs,
            out_specs=pl.BlockSpec((1, B, B), lambda i: (i, 0, 0)),
            compiler_params=pltpu.CompilerParams(
                dimension_semantics=("parallel",),
                vmem_limit_bytes=32 * 1024 * 1024,
            ),
        )(logit_scale, texts, pooled_img, w_img, w_txt)
        return out[0], out[1]

    lpi, lpt = pl.pallas_call(
        _clip_kernel_single,
        out_shape=(jax.ShapeDtypeStruct((B, B), jnp.float32),
                   jax.ShapeDtypeStruct((B, B), jnp.float32)),
        grid=(1,),
        in_specs=in_specs,
        out_specs=[pl.BlockSpec((B, B), lambda i: (0, 0)),
                   pl.BlockSpec((B, B), lambda i: (0, 0))],
        compiler_params=pltpu.CompilerParams(
            dimension_semantics=("arbitrary",),
            vmem_limit_bytes=32 * 1024 * 1024,
        ),
    )(logit_scale, texts, pooled_img, w_img, w_txt)
    return lpi, lpt


# ----------------------------------------------------------------------------
# Parameters (synthetic linear stand-ins for the injected image/text encoders)
# and one-time inference preparation (exact weight pre-fusion by linearity).
# ----------------------------------------------------------------------------
def init_params(key, *, C=4, P=8, D=128, vocab=128):
    k1, k2, k3, k4 = jax.random.split(key, 4)
    patch_dim = C * P * P
    return {
        "patch": P,
        "w_patch": 0.02 * jax.random.normal(k1, (patch_dim, D), jnp.float32),
        "w_img_proj": 0.02 * jax.random.normal(k2, (D, D), jnp.float32),
        "tok_emb": 0.02 * jax.random.normal(k3, (vocab, D), jnp.float32),
        "w_txt_proj": 0.02 * jax.random.normal(k4, (D, D), jnp.float32),
        # nn.init.constant_(logit_scale, log(1/0.07)); torch param shape [1]
        "logit_scale": jnp.full((1,), np.log(1.0 / 0.07), jnp.float32),
    }


def fuse_params(params):
    """Pre-fuse the linear encoder weights once (exact by linearity, in f32)
    with the tiled Pallas matmul; cast the MXU operands to bf16."""
    w_img = pallas_matmul(params["w_patch"], params["w_img_proj"])   # [C*P*P,D]
    w_txt = pallas_matmul(params["tok_emb"], params["w_txt_proj"])   # [vocab,D]
    return {
        "w_img_fused": w_img.astype(jnp.bfloat16),
        "w_txt_fused": w_txt.astype(jnp.bfloat16),
        "logit_scale": params["logit_scale"],
    }


# ----------------------------------------------------------------------------
# Forward pass.  The only non-Pallas work left is the tiny patch mean-pool
# (commutes with the linear image encoder, done in f32 before the bf16 cast);
# the feature matmuls, token counting, normalization and similarity heads all
# run inside one Pallas kernel.
# ----------------------------------------------------------------------------
def clip_forward(fused, images, texts, *, patch):
    B, C, H, W = images.shape
    nh, nw = H // patch, W // patch

    # Mean over the (nh, nw) patch grid commutes with the linear patch embed +
    # projection (exact in f32); cast to bf16 only after pooling.
    pooled_img = images.reshape(B, C, nh, patch, nw, patch).mean(axis=(2, 4))
    pooled_img = pooled_img.reshape(B, C * patch * patch).astype(jnp.bfloat16)

    return clip_fused_forward(fused["logit_scale"], texts.astype(jnp.int32),
                              pooled_img, fused["w_img_fused"],
                              fused["w_txt_fused"])


if __name__ == "__main__":
    B, C, H, W = 8, 4, 16, 16
    P, L, VOCAB, D = 8, 8, 128, 128

    key = jax.random.PRNGKey(0)
    kp, ki, kt = jax.random.split(key, 3)
    params = init_params(kp, C=C, P=P, D=D, vocab=VOCAB)
    fused = fuse_params(params)                    # one-time Pallas pre-fusion

    images = jax.random.normal(ki, (B, C, H, W), jnp.float32)  # NCHW like torch
    texts = jax.random.randint(kt, (B, L), 0, VOCAB, jnp.int32)

    fwd = jax.jit(clip_forward, static_argnames=("patch",))
    logits_per_image, logits_per_text = fwd(fused, images, texts, patch=P)
    jax.block_until_ready((logits_per_image, logits_per_text))

    assert logits_per_image.shape == (B, B)
    assert logits_per_text.shape == (B, B)
    assert bool(jnp.all(jnp.isfinite(logits_per_image)))
    assert bool(jnp.all(jnp.isfinite(logits_per_text)))
    # logits_per_text must equal logits_per_image.T (same contractions).
    assert bool(jnp.allclose(logits_per_image, logits_per_text.T,
                             rtol=1e-4, atol=1e-4))
    print("KERNEL_OK")
</pallas_src>

<mosaic_0001>
module attributes {stable_mosaic.version = 11 : i64} {
  func.func @_matmul_kernel(%arg0: i32, %arg1: i32, %arg2: i32, %arg3: memref<256x128xf32, #tpu.memory_space<vmem>>, %arg4: memref<128x128xf32, #tpu.memory_space<vmem>>, %arg5: memref<256x128xf32, #tpu.memory_space<vmem>>) attributes {dimension_semantics = [#tpu.dimension_semantics<parallel>, #tpu.dimension_semantics<parallel>, #tpu.dimension_semantics<arbitrary>], iteration_bounds = array<i64: 1, 1, 1>, scalar_prefetch = 0 : i64, scratch_operands = 0 : i64, tpu.core_type = #tpu.core_type<tc>, window_params = [{transform_indices = @transform_0, window_bounds = array<i64: 256, 128>}, {transform_indices = @transform_1, window_bounds = array<i64: 128, 128>}, {transform_indices = @transform_2, window_bounds = array<i64: 256, 128>}]} {
    %c0_i32 = arith.constant 0 : i32
    %0 = arith.cmpi eq, %arg2, %c0_i32 : i32
    %1 = arith.extui %0 : i1 to i32
    %c0_i32_0 = arith.constant 0 : i32
    %2 = arith.cmpi ne, %1, %c0_i32_0 : i32
    scf.if %2 {
      %cst_8 = arith.constant 0.000000e+00 : f32
      %9 = vector.broadcast %cst_8 : f32 to vector<256x128xf32>
      %c0_9 = arith.constant 0 : index
      %c0_10 = arith.constant 0 : index
      %10 = vector.load %arg5[%c0_9, %c0_10] : memref<256x128xf32, #tpu.memory_space<vmem>>, vector<256x128xf32>
      tpu.vector_store %arg5[%c0_9, %c0_10], %9 {strides = array<i32>} : memref<256x128xf32, #tpu.memory_space<vmem>>, vector<256x128xf32>,
    } else {
    }
    %c0 = arith.constant 0 : index
    %c0_1 = arith.constant 0 : index
    %3 = vector.load %arg5[%c0, %c0_1] : memref<256x128xf32, #tpu.memory_space<vmem>>, vector<256x128xf32>
    %c0_2 = arith.constant 0 : index
    %c0_3 = arith.constant 0 : index
    %4 = vector.load %arg3[%c0_2, %c0_3] : memref<256x128xf32, #tpu.memory_space<vmem>>, vector<256x128xf32>
    %c0_4 = arith.constant 0 : index
    %c0_5 = arith.constant 0 : index
    %5 = vector.load %arg4[%c0_4, %c0_5] : memref<128x128xf32, #tpu.memory_space<vmem>>, vector<128x128xf32>
    %cst = arith.constant dense<0.000000e+00> : vector<256x128xf32>
    %6 = tpu.matmul %4, %5, %cst {dimension_numbers = #tpu.dot_dimension_numbers<[1], [0], [0], [1], [0, 0, 1, 1], [], []>} : vector<256x128xf32>, vector<128x128xf32>, vector<256x128xf32> -> vector<256x128xf32>
    %7 = arith.addf %3, %6 : vector<256x128xf32>
    %c0_6 = arith.constant 0 : index
    %c0_7 = arith.constant 0 : index
    %8 = vector.load %arg5[%c0_6, %c0_7] : memref<256x128xf32, #tpu.memory_space<vmem>>, vector<256x128xf32>
    tpu.vector_store %arg5[%c0_6, %c0_7], %7 {strides = array<i32>} : memref<256x128xf32, #tpu.memory_space<vmem>>, vector<256x128xf32>,
    return
  }
  func.func @transform_0(%arg0: i32, %arg1: i32, %arg2: i32) -> (i32, i32) {
    %c0_i32 = arith.constant 0 : i32
    return %arg0, %arg2 : i32, i32
  }
  func.func @transform_1(%arg0: i32, %arg1: i32, %arg2: i32) -> (i32, i32) {
    %c0_i32 = arith.constant 0 : i32
    return %arg2, %arg1 : i32, i32
  }
  func.func @transform_2(%arg0: i32, %arg1: i32, %arg2: i32) -> (i32, i32) {
    %c0_i32 = arith.constant 0 : i32
    return %arg0, %arg1 : i32, i32
  }
}

</mosaic_0001>

<llo_original>
// kernel: tpu_custom_call.1
$region0: #{tpu_custom_call.1}
  #allocation0 [shape = 'u32[]', space=smem, size = 0x4, offset = 0x4, fixed_abs, tag = 'smem constant byte address 0x4 - core index']
  #allocation1 [shape = 'u32[144,128]{1,0:T(1,128)}', space=vmem, size = 0x12000, scoped, tag = 'internal scratch']
  %s0 = inlined_call_operand.hbm [shape: f32[256,128], index: 0, kind: input, shape index: {}]
  %s1 = inlined_call_operand.hbm [shape: f32[128,128], index: 1, kind: input, shape index: {}]
  %s2 = inlined_call_operand.hbm [shape: f32[256,128], index: 2, kind: output, shape index: {}]
  %s3 = sld [smem:[#allocation0]]
  $region30: #{tpu_custom_call.1} parent=0
    _
  %s5 = ssub.s32 1, %s3
  %s6 = scalar_select 0, %s5, %s3
  $region1: #{tpu_custom_call.1} parent=0
    #allocation2 [shape = 'u8[131072]{0}', space=vmem, size = 0x20000, scoped, tag = 'input window, operand 0, single buffered']
    #allocation3 [shape = 's32[1]{0}', space=sflag, size = 0x4, scoped, tag = 'scoped memory for tpu_custom_call.1']
    #allocation4 [shape = 's32[1]{0}', space=sflag, size = 0x4, scoped, tag = 'scoped memory for tpu_custom_call.1']
    #allocation5 [shape = 'u8[65536]{0}', space=vmem, size = 0x10000, scoped, tag = 'input window, operand 1, single buffered']
    #allocation6 [shape = 's32[1]{0}', space=sflag, size = 0x4, scoped, tag = 'scoped memory for tpu_custom_call.1']
    #allocation7 [shape = 'u8[131072]{0}', space=vmem, size = 0x20000, scoped, tag = 'output window, operand 0, single buffered']
    %7 = vsyncpa [#allocation3], 0
    %8 = vsyncpa [#allocation6], 0
    %9 = vsyncpa [#allocation4], 0
    // Predicated region
    $region2: #{tpu_custom_call.1} parent=1 // pred_check
      _
    $region3: #{tpu_custom_call.1} parent=1 // pred_check_branch
      %11 = sbr.rel (0) target = $region5
    $region4: #{tpu_custom_call.1} parent=1 // pred_region
      %s13 = ssub.s32 4096, 4096
      %14 = vsyncadd [#allocation3], %s13
      %s15 = sshll.u32 [#allocation2], 4
      %s16 = int_to_ptr.vmem [resolvable:$true] %s15
      %21 = dma.hbm_to_vmem [thread:$0]  %s0, 4096, %s16, [#allocation3], 128, 128, 8
    $region5: #{tpu_custom_call.1} parent=1 // pred_fallthru
      _
    // Predicated region
    $region6: #{tpu_custom_call.1} parent=1 // pred_check
      _
    $region7: #{tpu_custom_call.1} parent=1 // pred_check_branch
      %23 = sbr.rel (0) target = $region9
    $region8: #{tpu_custom_call.1} parent=1 // pred_region
      %s25 = ssub.s32 2048, 2048
      %26 = vsyncadd [#allocation6], %s25
      %s27 = sshll.u32 [#allocation5], 4
      %s28 = int_to_ptr.vmem [resolvable:$true] %s27
      %33 = dma.hbm_to_vmem [thread:$0]  %s1, 2048, %s28, [#allocation6], 128, 128, 8
    $region9: #{tpu_custom_call.1} parent=1 // pred_fallthru
      _
    // Predicated region
    $region10: #{tpu_custom_call.1} parent=1 // pred_check
      _
    $region11: #{tpu_custom_call.1} parent=1 // pred_check_branch
      %35 = sbr.rel (0) target = $region13
    $region12: #{tpu_custom_call.1} parent=1 // pred_region
      %36 = dma.done [#allocation3], 4096
    $region13: #{tpu_custom_call.1} parent=1 // pred_fallthru
      _
    // Predicated region
    $region14: #{tpu_custom_call.1} parent=1 // pred_check
      _
    $region15: #{tpu_custom_call.1} parent=1 // pred_check_branch
      %38 = sbr.rel (0) target = $region17
    $region16: #{tpu_custom_call.1} parent=1 // pred_region
      %39 = dma.done [#allocation6], 2048
    $region17: #{tpu_custom_call.1} parent=1 // pred_fallthru
      _
    %p40 = scmp.eq.s32.totalorder 0, 0
    // Predicated region
    $region18: #{tpu_custom_call.1} parent=1 // pred_check
      %p41 = pneg %p40
    $region19: #{tpu_custom_call.1} parent=1 // pred_check_branch
      %43 = sbr.rel (%p41) target = $region21
    $region20: #{tpu_custom_call.1} parent=1 // pred_region
      %44 = vst [vmem:[#allocation7] sm:$0xff] 0.0
      %45 = vst [vmem:[#allocation7 + $0x8] sm:$0xff] 0.0
      %46 = vst [vmem:[#allocation7 + $0x10] sm:$0xff] 0.0
      %47 = vst [vmem:[#allocation7 + $0x18] sm:$0xff] 0.0
      %48 = vst [vmem:[#allocation7 + $0x20] sm:$0xff] 0.0
      %49 = vst [vmem:[#allocation7 + $0x28] sm:$0xff] 0.0
      %50 = vst [vmem:[#allocation7 + $0x30] sm:$0xff] 0.0
      %51 = vst [vmem:[#allocation7 + $0x38] sm:$0xff] 0.0
      %52 = vst [vmem:[#allocation7 + $0x40] sm:$0xff] 0.0
      %53 = vst [vmem:[#allocation7 + $0x48] sm:$0xff] 0.0
      %54 = vst [vmem:[#allocation7 + $0x50] sm:$0xff] 0.0
      %55 = vst [vmem:[#allocation7 + $0x58] sm:$0xff] 0.0
      %56 = vst [vmem:[#allocation7 + $0x60] sm:$0xff] 0.0
      %57 = vst [vmem:[#allocation7 + $0x68] sm:$0xff] 0.0
      %58 = vst [vmem:[#allocation7 + $0x70] sm:$0xff] 0.0
      %59 = vst [vmem:[#allocation7 + $0x78] sm:$0xff] 0.0
      %60 = vst [vmem:[#allocation7 + $0x80] sm:$0xff] 0.0
      %61 = vst [vmem:[#allocation7 + $0x88] sm:$0xff] 0.0
      %62 = vst [vmem:[#allocation7 + $0x90] sm:$0xff] 0.0
      %63 = vst [vmem:[#allocation7 + $0x98] sm:$0xff] 0.0
      %64 = vst [vmem:[#allocation7 + $0xa0] sm:$0xff] 0.0
      %65 = vst [vmem:[#allocation7 + $0xa8] sm:$0xff] 0.0
      %66 = vst [vmem:[#allocation7 + $0xb0] sm:$0xff] 0.0
      %67 = vst [vmem:[#allocation7 + $0xb8] sm:$0xff] 0.0
      %68 = vst [vmem:[#allocation7 + $0xc0] sm:$0xff] 0.0
      %69 = vst [vmem:[#allocation7 + $0xc8] sm:$0xff] 0.0
      %70 = vst [vmem:[#allocation7 + $0xd0] sm:$0xff] 0.0
      %71 = vst [vmem:[#allocation7 + $0xd8] sm:$0xff] 0.0
      %72 = vst [vmem:[#allocation7 + $0xe0] sm:$0xff] 0.0
      %73 = vst [vmem:[#allocation7 + $0xe8] sm:$0xff] 0.0
      %74 = vst [vmem:[#allocation7 + $0xf0] sm:$0xff] 0.0
      %75 = vst [vmem:[#allocation7 + $0xf8] sm:$0xff] 0.0
    $region21: #{tpu_custom_call.1} parent=1 // pred_fallthru
      _
    %v76 = vld [vmem:[#allocation7] sm:$0xff]
    %v77 = vld [vmem:[#allocation7 + $0x8] sm:$0xff]
    %v78 = vld [vmem:[#allocation7 + $0x10] sm:$0xff]
    %v79 = vld [vmem:[#allocation7 + $0x18] sm:$0xff]
    %v80 = vld [vmem:[#allocation7 + $0x20] sm:$0xff]
    %v81 = vld [vmem:[#allocation7 + $0x28] sm:$0xff]
    %v82 = vld [vmem:[#allocation7 + $0x30] sm:$0xff]
    %v83 = vld [vmem:[#allocation7 + $0x38] sm:$0xff]
    %v84 = vld [vmem:[#allocation7 + $0x40] sm:$0xff]
    %v85 = vld [vmem:[#allocation7 + $0x48] sm:$0xff]
    %v86 = vld [vmem:[#allocation7 + $0x50] sm:$0xff]
    %v87 = vld [vmem:[#allocation7 + $0x58] sm:$0xff]
    %v88 = vld [vmem:[#allocation7 + $0x60] sm:$0xff]
    %v89 = vld [vmem:[#allocation7 + $0x68] sm:$0xff]
    %v90 = vld [vmem:[#allocation7 + $0x70] sm:$0xff]
    %v91 = vld [vmem:[#allocation7 + $0x78] sm:$0xff]
    %v92 = vld [vmem:[#allocation7 + $0x80] sm:$0xff]
    %v93 = vld [vmem:[#allocation7 + $0x88] sm:$0xff]
    %v94 = vld [vmem:[#allocation7 + $0x90] sm:$0xff]
    %v95 = vld [vmem:[#allocation7 + $0x98] sm:$0xff]
    %v96 = vld [vmem:[#allocation7 + $0xa0] sm:$0xff]
    %v97 = vld [vmem:[#allocation7 + $0xa8] sm:$0xff]
    %v98 = vld [vmem:[#allocation7 + $0xb0] sm:$0xff]
    %v99 = vld [vmem:[#allocation7 + $0xb8] sm:$0xff]
    %v100 = vld [vmem:[#allocation7 + $0xc0] sm:$0xff]
    %v101 = vld [vmem:[#allocation7 + $0xc8] sm:$0xff]
    %v102 = vld [vmem:[#allocation7 + $0xd0] sm:$0xff]
    %v103 = vld [vmem:[#allocation7 + $0xd8] sm:$0xff]
    %v104 = vld [vmem:[#allocation7 + $0xe0] sm:$0xff]
    %v105 = vld [vmem:[#allocation7 + $0xe8] sm:$0xff]
    %v106 = vld [vmem:[#allocation7 + $0xf0] sm:$0xff]
    %v107 = vld [vmem:[#allocation7 + $0xf8] sm:$0xff]
    %v108 = vld [vmem:[#allocation2] sm:$0xff]
    %v109 = vld [vmem:[#allocation2 + $0x8] sm:$0xff]
    %v110 = vld [vmem:[#allocation2 + $0x10] sm:$0xff]
    %v111 = vld [vmem:[#allocation2 + $0x18] sm:$0xff]
    %v112 = vld [vmem:[#allocation2 + $0x20] sm:$0xff]
    %v113 = vld [vmem:[#allocation2 + $0x28] sm:$0xff]
    %v114 = vld [vmem:[#allocation2 + $0x30] sm:$0xff]
    %v115 = vld [vmem:[#allocation2 + $0x38] sm:$0xff]
    %v116 = vld [vmem:[#allocation2 + $0x40] sm:$0xff]
    %v117 = vld [vmem:[#allocation2 + $0x48] sm:$0xff]
    %v118 = vld [vmem:[#allocation2 + $0x50] sm:$0xff]
    %v119 = vld [vmem:[#allocation2 + $0x58] sm:$0xff]
    %v120 = vld [vmem:[#allocation2 + $0x60] sm:$0xff]
    %v121 = vld [vmem:[#allocation2 + $0x68] sm:$0xff]
    %v122 = vld [vmem:[#allocation2 + $0x70] sm:$0xff]
    %v123 = vld [vmem:[#allocation2 + $0x78] sm:$0xff]
    %v124 = vld [vmem:[#allocation2 + $0x80] sm:$0xff]
    %v125 = vld [vmem:[#allocation2 + $0x88] sm:$0xff]
    %v126 = vld [vmem:[#allocation2 + $0x90] sm:$0xff]
    %v127 = vld [vmem:[#allocation2 + $0x98] sm:$0xff]
    %v128 = vld [vmem:[#allocation2 + $0xa0] sm:$0xff]
    %v129 = vld [vmem:[#allocation2 + $0xa8] sm:$0xff]
    %v130 = vld [vmem:[#allocation2 + $0xb0] sm:$0xff]
    %v131 = vld [vmem:[#allocation2 + $0xb8] sm:$0xff]
    %v132 = vld [vmem:[#allocation2 + $0xc0] sm:$0xff]
    %v133 = vld [vmem:[#allocation2 + $0xc8] sm:$0xff]
    %v134 = vld [vmem:[#allocation2 + $0xd0] sm:$0xff]
    %v135 = vld [vmem:[#allocation2 + $0xd8] sm:$0xff]
    %v136 = vld [vmem:[#allocation2 + $0xe0] sm:$0xff]
    %v137 = vld [vmem:[#allocation2 + $0xe8] sm:$0xff]
    %v138 = vld [vmem:[#allocation2 + $0xf0] sm:$0xff]
    %v139 = vld [vmem:[#allocation2 + $0xf8] sm:$0xff]
    %v140 = vld [vmem:[#allocation5] sm:$0xff]
    %v141 = vld [vmem:[#allocation5 + $0x8] sm:$0xff]
    %v142 = vld [vmem:[#allocation5 + $0x10] sm:$0xff]
    %v143 = vld [vmem:[#allocation5 + $0x18] sm:$0xff]
    %v144 = vld [vmem:[#allocation5 + $0x20] sm:$0xff]
    %v145 = vld [vmem:[#allocation5 + $0x28] sm:$0xff]
    %v146 = vld [vmem:[#allocation5 + $0x30] sm:$0xff]
    %v147 = vld [vmem:[#allocation5 + $0x38] sm:$0xff]
    %v148 = vld [vmem:[#allocation5 + $0x40] sm:$0xff]
    %v149 = vld [vmem:[#allocation5 + $0x48] sm:$0xff]
    %v150 = vld [vmem:[#allocation5 + $0x50] sm:$0xff]
    %v151 = vld [vmem:[#allocation5 + $0x58] sm:$0xff]
    %v152 = vld [vmem:[#allocation5 + $0x60] sm:$0xff]
    %v153 = vld [vmem:[#allocation5 + $0x68] sm:$0xff]
    %v154 = vld [vmem:[#allocation5 + $0x70] sm:$0xff]
    %v155 = vld [vmem:[#allocation5 + $0x78] sm:$0xff]
    %156 = vmatprep.subr.mxu0 0.0
    %157 = vmatpush1.msra.mxu0 %v140
    %158 = vmatprep.subr.mxu0 0.0
    %159 = vmatpush1.msra.mxu0 %v141
    %160 = vmatprep.subr.mxu0 0.0
    %161 = vmatpush1.msra.mxu0 %v142
    %162 = vmatprep.subr.mxu0 0.0
    %163 = vmatpush1.msra.mxu0 %v143
    %164 = vmatprep.subr.mxu0 0.0
    %165 = vmatpush1.msra.mxu0 %v144
    %166 = vmatprep.subr.mxu0 0.0
    %167 = vmatpush1.msra.mxu0 %v145
    %168 = vmatprep.subr.mxu0 0.0
    %169 = vmatpush1.msra.mxu0 %v146
    %170 = vmatprep.subr.mxu0 0.0
    %171 = vmatpush1.msra.mxu0 %v147
    %172 = vmatprep.subr.mxu0 0.0
    %173 = vmatpush1.msra.mxu0 %v148
    %174 = vmatprep.subr.mxu0 0.0
    %175 = vmatpush1.msra.mxu0 %v149
    %176 = vmatprep.subr.mxu0 0.0
    %177 = vmatpush1.msra.mxu0 %v150
    %178 = vmatprep.subr.mxu0 0.0
    %179 = vmatpush1.msra.mxu0 %v151
    %180 = vmatprep.subr.mxu0 0.0
    %181 = vmatpush1.msra.mxu0 %v152
    %182 = vmatprep.subr.mxu0 0.0
    %183 = vmatpush1.msra.mxu0 %v153
    %184 = vmatprep.subr.mxu0 0.0
    %185 = vmatpush1.msra.mxu0 %v154
    %186 = vmatprep.subr.mxu0 0.0
    %187 = vmatpush1.msra.mxu0 %v155
    %188 = vmatprep.subr.mxu0 0.0
    %189 = vmatpush1.msra.mxu0 0.0
    %190 = vmatprep.subr.mxu0 0.0
    %191 = vmatpush1.msra.mxu0 0.0
    %192 = vmatprep.subr.mxu0 0.0
    %193 = vmatpush1.msra.mxu0 0.0
    %194 = vmatprep.subr.mxu0 0.0
    %195 = vmatpush1.msra.mxu0 0.0
    %196 = vmatprep.subr.mxu0 0.0
    %197 = vmatpush1.msra.mxu0 0.0
    %198 = vmatprep.subr.mxu0 0.0
    %199 = vmatpush1.msra.mxu0 0.0
    %200 = vmatprep.subr.mxu0 0.0
    %201 = vmatpush1.msra.mxu0 0.0
    %202 = vmatprep.subr.mxu0 0.0
    %203 = vmatpush1.msra.mxu0 0.0
    %204 = vmatprep.subr.mxu0 0.0
    %205 = vmatpush1.msra.mxu0 0.0
    %206 = vmatprep.subr.mxu0 0.0
    %207 = vmatpush1.msra.mxu0 0.0
    %208 = vmatprep.subr.mxu0 0.0
    %209 = vmatpush1.msra.mxu0 0.0
    %210 = vmatprep.subr.mxu0 0.0
    %211 = vmatpush1.msra.mxu0 0.0
    %212 = vmatprep.subr.mxu0 0.0
    %213 = vmatpush1.msra.mxu0 0.0
    %214 = vmatprep.subr.mxu0 0.0
    %215 = vmatpush1.msra.mxu0 0.0
    %216 = vmatprep.subr.mxu0 0.0
    %217 = vmatpush1.msra.mxu0 0.0
    %218 = vmatprep.subr.mxu0 0.0
    %219 = vmatpush1.msra.mxu0 0.0
    %220 = vmatprep.mubr.f32.mxu0 0.0
    %221 = vmatmul.mubr.f32.gmra.mrb[0].mxu0 %v108
    %v222 = vpop.f32.mrb[0].mxu0
    %v223 = vadd.f32 0.0, %v222
    %v224 = vpop.f32.mrb[0].mxu0
    %225 = vmatprep.mubr.f32.mxu0 0.0
    %226 = vmatmul.mubr.f32.gmra.mrb[0].mxu0 %v109
    %v227 = vpop.f32.mrb[0].mxu0
    %v228 = vadd.f32 0.0, %v227
    %v229 = vpop.f32.mrb[0].mxu0
    %230 = vmatprep.mubr.f32.mxu0 0.0
    %231 = vmatmul.mubr.f32.gmra.mrb[0].mxu0 %v110
    %v232 = vpop.f32.mrb[0].mxu0
    %v233 = vadd.f32 0.0, %v232
    %v234 = vpop.f32.mrb[0].mxu0
    %235 = vmatprep.mubr.f32.mxu0 0.0
    %236 = vmatmul.mubr.f32.gmra.mrb[0].mxu0 %v111
    %v237 = vpop.f32.mrb[0].mxu0
    %v238 = vadd.f32 0.0, %v237
    %v239 = vpop.f32.mrb[0].mxu0
    %240 = vmatprep.mubr.f32.mxu0 0.0
    %241 = vmatmul.mubr.f32.gmra.mrb[0].mxu0 %v112
    %v242 = vpop.f32.mrb[0].mxu0
    %v243 = vadd.f32 0.0, %v242
    %v244 = vpop.f32.mrb[0].mxu0
    %245 = vmatprep.mubr.f32.mxu0 0.0
    %246 = vmatmul.mubr.f32.gmra.mrb[0].mxu0 %v113
    %v247 = vpop.f32.mrb[0].mxu0
    %v248 = vadd.f32 0.0, %v247
    %v249 = vpop.f32.mrb[0].mxu0
    %250 = vmatprep.mubr.f32.mxu0 0.0
    %251 = vmatmul.mubr.f32.gmra.mrb[0].mxu0 %v114
    %v252 = vpop.f32.mrb[0].mxu0
    %v253 = vadd.f32 0.0, %v252
    %v254 = vpop.f32.mrb[0].mxu0
    %255 = vmatprep.mubr.f32.mxu0 0.0
    %256 = vmatmul.mubr.f32.gmra.mrb[0].mxu0 %v115
    %v257 = vpop.f32.mrb[0].mxu0
    %v258 = vadd.f32 0.0, %v257
    %v259 = vpop.f32.mrb[0].mxu0
    %260 = vmatprep.mubr.f32.mxu0 0.0
    %261 = vmatmul.mubr.f32.gmra.mrb[0].mxu0 %v116
    %v262 = vpop.f32.mrb[0].mxu0
    %v263 = vadd.f32 0.0, %v262
    %v264 = vpop.f32.mrb[0].mxu0
    %265 = vmatprep.mubr.f32.mxu0 0.0
    %266 = vmatmul.mubr.f32.gmra.mrb[0].mxu0 %v117
    %v267 = vpop.f32.mrb[0].mxu0
    %v268 = vadd.f32 0.0, %v267
    %v269 = vpop.f32.mrb[0].mxu0
    %270 = vmatprep.mubr.f32.mxu0 0.0
    %271 = vmatmul.mubr.f32.gmra.mrb[0].mxu0 %v118
    %v272 = vpop.f32.mrb[0].mxu0
    %v273 = vadd.f32 0.0, %v272
    %v274 = vpop.f32.mrb[0].mxu0
    %275 = vmatprep.mubr.f32.mxu0 0.0
    %276 = vmatmul.mubr.f32.gmra.mrb[0].mxu0 %v119
    %v277 = vpop.f32.mrb[0].mxu0
    %v278 = vadd.f32 0.0, %v277
    %v279 = vpop.f32.mrb[0].mxu0
    %280 = vmatprep.mubr.f32.mxu0 0.0
    %281 = vmatmul.mubr.f32.gmra.mrb[0].mxu0 %v120
    %v282 = vpop.f32.mrb[0].mxu0
    %v283 = vadd.f32 0.0, %v282
    %v284 = vpop.f32.mrb[0].mxu0
    %285 = vmatprep.mubr.f32.mxu0 0.0
    %286 = vmatmul.mubr.f32.gmra.mrb[0].mxu0 %v121
    %v287 = vpop.f32.mrb[0].mxu0
    %v288 = vadd.f32 0.0, %v287
    %v289 = vpop.f32.mrb[0].mxu0
    %290 = vmatprep.mubr.f32.mxu0 0.0
    %291 = vmatmul.mubr.f32.gmra.mrb[0].mxu0 %v122
    %v292 = vpop.f32.mrb[0].mxu0
    %v293 = vadd.f32 0.0, %v292
    %v294 = vpop.f32.mrb[0].mxu0
    %295 = vmatprep.mubr.f32.mxu0 0.0
    %296 = vmatmul.mubr.f32.gmra.mrb[0].mxu0 %v123
    %v297 = vpop.f32.mrb[0].mxu0
    %v298 = vadd.f32 0.0, %v297
    %v299 = vpop.f32.mrb[0].mxu0
    %300 = vmatprep.mubr.f32.mxu0 0.0
    %301 = vmatmul.mubr.f32.gmra.mrb[0].mxu0 %v124
    %v302 = vpop.f32.mrb[0].mxu0
    %v303 = vadd.f32 0.0, %v302
    %v304 = vpop.f32.mrb[0].mxu0
    %305 = vmatprep.mubr.f32.mxu0 0.0
    %306 = vmatmul.mubr.f32.gmra.mrb[0].mxu0 %v125
    %v307 = vpop.f32.mrb[0].mxu0
    %v308 = vadd.f32 0.0, %v307
    %v309 = vpop.f32.mrb[0].mxu0
    %310 = vmatprep.mubr.f32.mxu0 0.0
    %311 = vmatmul.mubr.f32.gmra.mrb[0].mxu0 %v126
    %v312 = vpop.f32.mrb[0].mxu0
    %v313 = vadd.f32 0.0, %v312
    %v314 = vpop.f32.mrb[0].mxu0
    %315 = vmatprep.mubr.f32.mxu0 0.0
    %316 = vmatmul.mubr.f32.gmra.mrb[0].mxu0 %v127
    %v317 = vpop.f32.mrb[0].mxu0
    %v318 = vadd.f32 0.0, %v317
    %v319 = vpop.f32.mrb[0].mxu0
    %320 = vmatprep.mubr.f32.mxu0 0.0
    %321 = vmatmul.mubr.f32.gmra.mrb[0].mxu0 %v128
    %v322 = vpop.f32.mrb[0].mxu0
    %v323 = vadd.f32 0.0, %v322
    %v324 = vpop.f32.mrb[0].mxu0
    %325 = vmatprep.mubr.f32.mxu0 0.0
    %326 = vmatmul.mubr.f32.gmra.mrb[0].mxu0 %v129
    %v327 = vpop.f32.mrb[0].mxu0
    %v328 = vadd.f32 0.0, %v327
    %v329 = vpop.f32.mrb[0].mxu0
    %330 = vmatprep.mubr.f32.mxu0 0.0
    %331 = vmatmul.mubr.f32.gmra.mrb[0].mxu0 %v130
    %v332 = vpop.f32.mrb[0].mxu0
    %v333 = vadd.f32 0.0, %v332
    %v334 = vpop.f32.mrb[0].mxu0
    %335 = vmatprep.mubr.f32.mxu0 0.0
    %336 = vmatmul.mubr.f32.gmra.mrb[0].mxu0 %v131
    %v337 = vpop.f32.mrb[0].mxu0
    %v338 = vadd.f32 0.0, %v337
    %v339 = vpop.f32.mrb[0].mxu0
    %340 = vmatprep.mubr.f32.mxu0 0.0
    %341 = vmatmul.mubr.f32.gmra.mrb[0].mxu0 %v132
    %v342 = vpop.f32.mrb[0].mxu0
    %v343 = vadd.f32 0.0, %v342
    %v344 = vpop.f32.mrb[0].mxu0
    %345 = vmatprep.mubr.f32.mxu0 0.0
    %346 = vmatmul.mubr.f32.gmra.mrb[0].mxu0 %v133
    %v347 = vpop.f32.mrb[0].mxu0
    %v348 = vadd.f32 0.0, %v347
    %v349 = vpop.f32.mrb[0].mxu0
    %350 = vmatprep.mubr.f32.mxu0 0.0
    %351 = vmatmul.mubr.f32.gmra.mrb[0].mxu0 %v134
    %v352 = vpop.f32.mrb[0].mxu0
    %v353 = vadd.f32 0.0, %v352
    %v354 = vpop.f32.mrb[0].mxu0
    %355 = vmatprep.mubr.f32.mxu0 0.0
    %356 = vmatmul.mubr.f32.gmra.mrb[0].mxu0 %v135
    %v357 = vpop.f32.mrb[0].mxu0
    %v358 = vadd.f32 0.0, %v357
    %v359 = vpop.f32.mrb[0].mxu0
    %360 = vmatprep.mubr.f32.mxu0 0.0
    %361 = vmatmul.mubr.f32.gmra.mrb[0].mxu0 %v136
    %v362 = vpop.f32.mrb[0].mxu0
    %v363 = vadd.f32 0.0, %v362
    %v364 = vpop.f32.mrb[0].mxu0
    %365 = vmatprep.mubr.f32.mxu0 0.0
    %366 = vmatmul.mubr.f32.gmra.mrb[0].mxu0 %v137
    %v367 = vpop.f32.mrb[0].mxu0
    %v368 = vadd.f32 0.0, %v367
    %v369 = vpop.f32.mrb[0].mxu0
    %370 = vmatprep.mubr.f32.mxu0 0.0
    %371 = vmatmul.mubr.f32.gmra.mrb[0].mxu0 %v138
    %v372 = vpop.f32.mrb[0].mxu0
    %v373 = vadd.f32 0.0, %v372
    %v374 = vpop.f32.mrb[0].mxu0
    %375 = vmatprep.mubr.f32.mxu0 0.0
    %376 = vmatmul.mubr.f32.gmra.mrb[0].mxu0 %v139
    %v377 = vpop.f32.mrb[0].mxu0
    %v378 = vadd.f32 0.0, %v377
    %v379 = vpop.f32.mrb[0].mxu0
    %380 = vdwg.mxu0
    %v381 = vadd.f32 %v76, %v223
    %v382 = vadd.f32 %v77, %v228
    %v383 = vadd.f32 %v78, %v233
    %v384 = vadd.f32 %v79, %v238
    %v385 = vadd.f32 %v80, %v243
    %v386 = vadd.f32 %v81, %v248
    %v387 = vadd.f32 %v82, %v253
    %v388 = vadd.f32 %v83, %v258
    %v389 = vadd.f32 %v84, %v263
    %v390 = vadd.f32 %v85, %v268
    %v391 = vadd.f32 %v86, %v273
    %v392 = vadd.f32 %v87, %v278
    %v393 = vadd.f32 %v88, %v283
    %v394 = vadd.f32 %v89, %v288
    %v395 = vadd.f32 %v90, %v293
    %v396 = vadd.f32 %v91, %v298
    %v397 = vadd.f32 %v92, %v303
    %v398 = vadd.f32 %v93, %v308
    %v399 = vadd.f32 %v94, %v313
    %v400 = vadd.f32 %v95, %v318
    %v401 = vadd.f32 %v96, %v323
    %v402 = vadd.f32 %v97, %v328
    %v403 = vadd.f32 %v98, %v333
    %v404 = vadd.f32 %v99, %v338
    %v405 = vadd.f32 %v100, %v343
    %v406 = vadd.f32 %v101, %v348
    %v407 = vadd.f32 %v102, %v353
    %v408 = vadd.f32 %v103, %v358
    %v409 = vadd.f32 %v104, %v363
    %v410 = vadd.f32 %v105, %v368
    %v411 = vadd.f32 %v106, %v373
    %v412 = vadd.f32 %v107, %v378
    %413 = vst [vmem:[#allocation7] sm:$0xff] %v381
    %414 = vst [vmem:[#allocation7 + $0x8] sm:$0xff] %v382
    %415 = vst [vmem:[#allocation7 + $0x10] sm:$0xff] %v383
    %416 = vst [vmem:[#allocation7 + $0x18] sm:$0xff] %v384
    %417 = vst [vmem:[#allocation7 + $0x20] sm:$0xff] %v385
    %418 = vst [vmem:[#allocation7 + $0x28] sm:$0xff] %v386
    %419 = vst [vmem:[#allocation7 + $0x30] sm:$0xff] %v387
    %420 = vst [vmem:[#allocation7 + $0x38] sm:$0xff] %v388
    %421 = vst [vmem:[#allocation7 + $0x40] sm:$0xff] %v389
    %422 = vst [vmem:[#allocation7 + $0x48] sm:$0xff] %v390
    %423 = vst [vmem:[#allocation7 + $0x50] sm:$0xff] %v391
    %424 = vst [vmem:[#allocation7 + $0x58] sm:$0xff] %v392
    %425 = vst [vmem:[#allocation7 + $0x60] sm:$0xff] %v393
    %426 = vst [vmem:[#allocation7 + $0x68] sm:$0xff] %v394
    %427 = vst [vmem:[#allocation7 + $0x70] sm:$0xff] %v395
    %428 = vst [vmem:[#allocation7 + $0x78] sm:$0xff] %v396
    %429 = vst [vmem:[#allocation7 + $0x80] sm:$0xff] %v397
    %430 = vst [vmem:[#allocation7 + $0x88] sm:$0xff] %v398
    %431 = vst [vmem:[#allocation7 + $0x90] sm:$0xff] %v399
    %432 = vst [vmem:[#allocation7 + $0x98] sm:$0xff] %v400
    %433 = vst [vmem:[#allocation7 + $0xa0] sm:$0xff] %v401
    %434 = vst [vmem:[#allocation7 + $0xa8] sm:$0xff] %v402
    %435 = vst [vmem:[#allocation7 + $0xb0] sm:$0xff] %v403
    %436 = vst [vmem:[#allocation7 + $0xb8] sm:$0xff] %v404
    %437 = vst [vmem:[#allocation7 + $0xc0] sm:$0xff] %v405
    %438 = vst [vmem:[#allocation7 + $0xc8] sm:$0xff] %v406
    %439 = vst [vmem:[#allocation7 + $0xd0] sm:$0xff] %v407
    %440 = vst [vmem:[#allocation7 + $0xd8] sm:$0xff] %v408
    %441 = vst [vmem:[#allocation7 + $0xe0] sm:$0xff] %v409
    %442 = vst [vmem:[#allocation7 + $0xe8] sm:$0xff] %v410
    %443 = vst [vmem:[#allocation7 + $0xf0] sm:$0xff] %v411
    %444 = vst [vmem:[#allocation7 + $0xf8] sm:$0xff] %v412
    // Predicated region
    $region22: #{tpu_custom_call.1} parent=1 // pred_check
      _
    $region23: #{tpu_custom_call.1} parent=1 // pred_check_branch
      %446 = sbr.rel (0) target = $region25
    $region24: #{tpu_custom_call.1} parent=1 // pred_region
      %s448 = ssub.s32 4096, 4096
      %449 = vsyncadd [#allocation4], %s448
      %s450 = sshll.u32 [#allocation7], 4
      %s451 = int_to_ptr.vmem [resolvable:$true] %s450
      %456 = dma.vmem_to_hbm [thread:$0]  %s451, 4096, %s2, [#allocation4], 128, 128, 8
    $region25: #{tpu_custom_call.1} parent=1 // pred_fallthru
      _
    // Predicated region
    $region26: #{tpu_custom_call.1} parent=1 // pred_check
      _
    $region27: #{tpu_custom_call.1} parent=1 // pred_check_branch
      %458 = sbr.rel (0) target = $region29
    $region28: #{tpu_custom_call.1} parent=1 // pred_region
      %459 = dma.done [#allocation4], 4096
    $region29: #{tpu_custom_call.1} parent=1 // pred_fallthru
      _
    %460 = vsyncpa [#allocation3], 1
    %461 = vsyncpa [#allocation6], 1
    %462 = vsyncpa [#allocation4], 1

</llo_original>
